<compile_context>
chip_gen: v7x
topology: tpu7x:2x2x1
jax: 0.10.0
libtpu: 0.0.40
codegen_flags: <defaults>
</compile_context>

<pallas_src>
import math

import jax
import jax.numpy as jnp
from jax.experimental import pallas as pl
from jax.experimental.pallas import tpu as pltpu


def _round_up(x, m):
    return ((x + m - 1) // m) * m


def _make_kernel(pack, hidden):
    """Builds the fused 3-matmul kernel; `pack` rows are merged into lanes for
    the mediate store when pack > 1."""

    def kernel(x_ref, w1_ref, b1_ref, w2_ref, b2_ref, w3_ref, b3_ref,
               mediate_ref, y_ref):
        w_dtype = w1_ref.dtype  # compute/stream dtype of weights (f32 or bf16)

        # In-kernel cast of the streamed x tile (no extra HBM pass in the
        # wrapper); no-op when x already matches the weight dtype.
        x = x_ref[...].astype(w_dtype)

        h1 = jnp.dot(x, w1_ref[...],
                     preferred_element_type=jnp.float32) + b1_ref[...]
        h1 = jnp.maximum(h1, 0.0)

        h2 = jnp.dot(h1.astype(w_dtype), w2_ref[...],
                     preferred_element_type=jnp.float32) + b2_ref[...]
        h2 = jnp.maximum(h2, 0.0)

        if pack > 1:
            rows = h2.shape[0]
            # Row-major relayout (tm, hidden) -> (tm/pack, pack*hidden=128):
            # lane-dense stores + dense writeback DMA.  XLU has slack here.
            packed = h2.reshape(rows // pack, pack * hidden)
            mediate_ref[...] = packed.astype(mediate_ref.dtype)
        else:
            mediate_ref[...] = h2.astype(mediate_ref.dtype)

        y = jnp.dot(h2.astype(w_dtype), w3_ref[...],
                    preferred_element_type=jnp.float32) + b3_ref[...]
        y_ref[...] = y.astype(y_ref.dtype)

    return kernel


def net_mcd_forward(x, params, *, tm=2048, activation_dtype=None,
                    mediate_dtype=jnp.float32, pack_mediate=True):
    """Pallas forward for net_MCD.  Returns (mediate, y); y is always f32.

    activation_dtype=jnp.bfloat16 streams the weights (and computes the
    matmuls) in bf16; mediate_dtype=jnp.bfloat16 halves the dominant HBM
    write if the caller tolerates a bf16 intermediate.
    """
    w1, b1, w2, b2, w3, b3 = params
    in_dim, hidden = w1.shape
    out_dim = w3.shape[1]
    batch = x.shape[0]

    if activation_dtype is not None:
        # Only the tiny, fetched-once weights are cast in the wrapper; x is
        # cast inside the kernel so no extra HBM pass over the batch.
        w1 = w1.astype(activation_dtype)
        w2 = w2.astype(activation_dtype)
        w3 = w3.astype(activation_dtype)

    # 8-aligned batch tile; keep >=2 grid steps whenever batch allows so the
    # pipeline double-buffers and megacore (v7x) can split the batch.
    tm = max(8, min(int(tm), _round_up(pl.cdiv(batch, 2), 8)))
    grid_b = pl.cdiv(batch, tm)

    # Lane-dense mediate packing factor (e.g. hidden=32 -> pack=4 -> 128 lanes).
    pack = 1
    if pack_mediate and hidden < 128 and 128 % hidden == 0:
        p = 128 // hidden
        if batch % p == 0 and tm % (8 * p) == 0:
            pack = p

    # Scoped-VMEM budget: double-buffered x / mediate / y tiles (each padded to
    # 128 lanes, f32) plus ~3 f32 temporaries; clamp to [32 MiB, 64 MiB] so the
    # limit is safe on v5e/v6e (128 MiB physical) and v7x (64 MiB physical).
    est = tm * 128 * 4 * (2 + 2 + 2 + 3)
    vmem_limit = int(min(64 << 20, max(32 << 20, 2 * est)))

    compiler_params = pltpu.CompilerParams(
        dimension_semantics=("parallel",),   # megacore sharding on v7x
        vmem_limit_bytes=vmem_limit,
    )

    in_specs = [
        pl.BlockSpec((tm, in_dim), lambda i: (i, 0)),        # x  (streams)
        pl.BlockSpec((in_dim, hidden), lambda i: (0, 0)),    # w1 (VMEM-resident)
        pl.BlockSpec((1, hidden), lambda i: (0, 0)),         # b1
        pl.BlockSpec((hidden, hidden), lambda i: (0, 0)),    # w2
        pl.BlockSpec((1, hidden), lambda i: (0, 0)),         # b2
        pl.BlockSpec((hidden, out_dim), lambda i: (0, 0)),   # w3
        pl.BlockSpec((1, out_dim), lambda i: (0, 0)),        # b3
    ]

    def run(pack_):
        if pack_ > 1:
            med_spec = pl.BlockSpec((tm // pack_, pack_ * hidden), lambda i: (i, 0))
            med_shape = jax.ShapeDtypeStruct((batch // pack_, pack_ * hidden),
                                             mediate_dtype)
        else:
            med_spec = pl.BlockSpec((tm, hidden), lambda i: (i, 0))
            med_shape = jax.ShapeDtypeStruct((batch, hidden), mediate_dtype)

        out_specs = (
            med_spec,
            pl.BlockSpec((tm, out_dim), lambda i: (i, 0)),   # y
        )
        out_shape = (
            med_shape,
            jax.ShapeDtypeStruct((batch, out_dim), jnp.float32),
        )
        return pl.pallas_call(
            _make_kernel(pack_, hidden),
            grid=(grid_b,),
            in_specs=in_specs,
            out_specs=out_specs,
            out_shape=out_shape,
            compiler_params=compiler_params,
        )(x, w1, b1, w2, b2, w3, b3)

    if pack > 1:
        try:
            med_packed, y = run(pack)
            # Row-major re-view of the same bytes back to (batch, hidden).
            return med_packed.reshape(batch, hidden), y
        except Exception:
            # Toolchain without support for the in-kernel relayout: fall back
            # to the natural (tm, hidden) store layout.
            pass

    mediate, y = run(1)
    return mediate, y


def init_linear(key, in_dim, out_dim):
    # Deterministic init mimicking PyTorch's default U(-1/sqrt(in), 1/sqrt(in)).
    kw, kb = jax.random.split(key)
    bound = 1.0 / math.sqrt(in_dim)
    w = jax.random.uniform(kw, (in_dim, out_dim), jnp.float32, -bound, bound)
    b = jax.random.uniform(kb, (1, out_dim), jnp.float32, -bound, bound)
    return w, b


def reference_forward(x, params, activation_dtype=None):
    """Pure-JAX reference mirroring the kernel's dtype handling."""
    w1, b1, w2, b2, w3, b3 = params
    if activation_dtype is not None:
        w1 = w1.astype(activation_dtype)
        w2 = w2.astype(activation_dtype)
        w3 = w3.astype(activation_dtype)
    wd = w1.dtype
    h1 = jnp.maximum(
        jnp.dot(x.astype(wd), w1, preferred_element_type=jnp.float32) + b1, 0.0)
    h2 = jnp.maximum(
        jnp.dot(h1.astype(wd), w2, preferred_element_type=jnp.float32) + b2, 0.0)
    y = jnp.dot(h2.astype(wd), w3, preferred_element_type=jnp.float32) + b3
    return h2, y


if __name__ == "__main__":
    # Wine-quality regression shapes: 11 features -> hidden 32 -> 1 output.
    input_dim, hidden_dim, output_dim = 11, 32, 1

    key = jax.random.PRNGKey(0)
    kx, k1, k2, k3 = jax.random.split(key, 4)
    w1, b1 = init_linear(k1, input_dim, hidden_dim)
    w2, b2 = init_linear(k2, hidden_dim, hidden_dim)
    w3, b3 = init_linear(k3, hidden_dim, output_dim)
    params = (w1, b1, w2, b2, w3, b3)

    # Case 1: f32, batch=256, tm=128 -> 2 grid steps, lane-dense (packed)
    # mediate path (pack=4 -> 128-lane stores).
    batch = 256
    x = jax.random.normal(kx, (batch, input_dim), jnp.float32)
    mediate, y = net_mcd_forward(x, params, tm=128)
    mediate, y = jax.block_until_ready((mediate, y))
    med_ref, y_ref = reference_forward(x, params)
    assert mediate.shape == (batch, hidden_dim)
    assert y.shape == (batch, output_dim)
    assert jnp.allclose(mediate, med_ref, atol=1e-5, rtol=1e-5), "mediate mismatch"
    assert jnp.allclose(y, y_ref, atol=1e-5, rtol=1e-5), "y mismatch"

    # Case 2: ragged batch (200), f32 -> boundary-masked partial tile, natural
    # (unpacked) mediate layout, no pad/slice HBM round-trips.
    batch2 = 200
    x2 = jax.random.normal(jax.random.PRNGKey(1), (batch2, input_dim), jnp.float32)
    med2, y2 = net_mcd_forward(x2, params, tm=128)
    med2, y2 = jax.block_until_ready((med2, y2))
    med2_ref, y2_ref = reference_forward(x2, params)
    assert med2.shape == (batch2, hidden_dim)
    assert y2.shape == (batch2, output_dim)
    assert jnp.allclose(med2, med2_ref, atol=1e-5, rtol=1e-5), "ragged mediate mismatch"
    assert jnp.allclose(y2, y2_ref, atol=1e-5, rtol=1e-5), "ragged y mismatch"

    # Case 3: bf16 weights/compute + bf16 mediate output (HBM-traffic option),
    # packed store path; accumulation/bias/ReLU stay f32.
    med3, y3 = net_mcd_forward(x, params, tm=128,
                               activation_dtype=jnp.bfloat16,
                               mediate_dtype=jnp.bfloat16)
    med3, y3 = jax.block_until_ready((med3, y3))
    med3_ref, y3_ref = reference_forward(x, params, activation_dtype=jnp.bfloat16)
    assert med3.dtype == jnp.bfloat16
    assert jnp.allclose(med3.astype(jnp.float32), med3_ref, atol=2e-2, rtol=2e-2), \
        "bf16 mediate mismatch"
    assert jnp.allclose(y3, y3_ref, atol=2e-2, rtol=2e-2), "bf16 y mismatch"

    # Case 4: tiny batch (2) -> single partial 8-row tile, masked stores.
    x4 = jax.random.normal(jax.random.PRNGKey(2), (2, input_dim), jnp.float32)
    med4, y4 = net_mcd_forward(x4, params)
    med4, y4 = jax.block_until_ready((med4, y4))
    med4_ref, y4_ref = reference_forward(x4, params)
    assert jnp.allclose(med4, med4_ref, atol=1e-5, rtol=1e-5), "tiny mediate mismatch"
    assert jnp.allclose(y4, y4_ref, atol=1e-5, rtol=1e-5), "tiny y mismatch"

    print("KERNEL_OK")
</pallas_src>

<mosaic_0001>
module attributes {stable_mosaic.version = 11 : i64} {
  func.func @kernel(%arg0: i32, %arg1: memref<128x11xf32, #tpu.memory_space<vmem>>, %arg2: memref<11x32xf32, #tpu.memory_space<vmem>>, %arg3: memref<1x32xf32, #tpu.memory_space<vmem>>, %arg4: memref<32x32xf32, #tpu.memory_space<vmem>>, %arg5: memref<1x32xf32, #tpu.memory_space<vmem>>, %arg6: memref<32x1xf32, #tpu.memory_space<vmem>>, %arg7: memref<1x1xf32, #tpu.memory_space<vmem>>, %arg8: memref<32x128xf32, #tpu.memory_space<vmem>>, %arg9: memref<128x1xf32, #tpu.memory_space<vmem>>) attributes {dimension_semantics = [#tpu.dimension_semantics<parallel>], iteration_bounds = array<i64: 2>, scalar_prefetch = 0 : i64, scratch_operands = 0 : i64, tpu.core_type = #tpu.core_type<tc>, window_params = [{transform_indices = @transform_0, window_bounds = array<i64: 128, 11>}, {pipeline_mode = #tpu.pipeline_mode<synchronous>, transform_indices = @transform_1, window_bounds = array<i64: 11, 32>}, {pipeline_mode = #tpu.pipeline_mode<synchronous>, transform_indices = @transform_2, window_bounds = array<i64: 1, 32>}, {pipeline_mode = #tpu.pipeline_mode<synchronous>, transform_indices = @transform_3, window_bounds = array<i64: 32, 32>}, {pipeline_mode = #tpu.pipeline_mode<synchronous>, transform_indices = @transform_4, window_bounds = array<i64: 1, 32>}, {pipeline_mode = #tpu.pipeline_mode<synchronous>, transform_indices = @transform_5, window_bounds = array<i64: 32, 1>}, {pipeline_mode = #tpu.pipeline_mode<synchronous>, transform_indices = @transform_6, window_bounds = array<i64: 1, 1>}, {transform_indices = @transform_7, window_bounds = array<i64: 32, 128>}, {transform_indices = @transform_8, window_bounds = array<i64: 128, 1>}]} {
    %c0 = arith.constant 0 : index
    %c0_0 = arith.constant 0 : index
    %0 = vector.load %arg1[%c0, %c0_0] : memref<128x11xf32, #tpu.memory_space<vmem>>, vector<128x11xf32>
    %c0_1 = arith.constant 0 : index
    %c0_2 = arith.constant 0 : index
    %1 = vector.load %arg2[%c0_1, %c0_2] : memref<11x32xf32, #tpu.memory_space<vmem>>, vector<11x32xf32>
    %cst = arith.constant dense<0.000000e+00> : vector<128x32xf32>
    %2 = tpu.matmul %0, %1, %cst {dimension_numbers = #tpu.dot_dimension_numbers<[1], [0], [0], [1], [0, 0, 1, 1], [], []>} : vector<128x11xf32>, vector<11x32xf32>, vector<128x32xf32> -> vector<128x32xf32>
    %c0_3 = arith.constant 0 : index
    %c0_4 = arith.constant 0 : index
    %3 = vector.load %arg3[%c0_3, %c0_4] : memref<1x32xf32, #tpu.memory_space<vmem>>, vector<1x32xf32>
    %4 = vector.broadcast %3 : vector<1x32xf32> to vector<128x32xf32>
    %5 = arith.addf %2, %4 : vector<128x32xf32>
    %cst_5 = arith.constant 0.000000e+00 : f32
    %6 = vector.broadcast %cst_5 : f32 to vector<128x32xf32>
    %7 = arith.maximumf %5, %6 : vector<128x32xf32>
    %c0_6 = arith.constant 0 : index
    %c0_7 = arith.constant 0 : index
    %8 = vector.load %arg4[%c0_6, %c0_7] : memref<32x32xf32, #tpu.memory_space<vmem>>, vector<32x32xf32>
    %cst_8 = arith.constant dense<0.000000e+00> : vector<128x32xf32>
    %9 = tpu.matmul %7, %8, %cst_8 {dimension_numbers = #tpu.dot_dimension_numbers<[1], [0], [0], [1], [0, 0, 1, 1], [], []>} : vector<128x32xf32>, vector<32x32xf32>, vector<128x32xf32> -> vector<128x32xf32>
    %c0_9 = arith.constant 0 : index
    %c0_10 = arith.constant 0 : index
    %10 = vector.load %arg5[%c0_9, %c0_10] : memref<1x32xf32, #tpu.memory_space<vmem>>, vector<1x32xf32>
    %11 = vector.broadcast %10 : vector<1x32xf32> to vector<128x32xf32>
    %12 = arith.addf %9, %11 : vector<128x32xf32>
    %cst_11 = arith.constant 0.000000e+00 : f32
    %13 = vector.broadcast %cst_11 : f32 to vector<128x32xf32>
    %14 = arith.maximumf %12, %13 : vector<128x32xf32>
    %15 = vector.shape_cast %14 : vector<128x32xf32> to vector<32x128xf32>
    %c0_12 = arith.constant 0 : index
    %c0_13 = arith.constant 0 : index
    %16 = vector.load %arg8[%c0_12, %c0_13] : memref<32x128xf32, #tpu.memory_space<vmem>>, vector<32x128xf32>
    tpu.vector_store %arg8[%c0_12, %c0_13], %15 {strides = array<i32>} : memref<32x128xf32, #tpu.memory_space<vmem>>, vector<32x128xf32>,
    %c0_14 = arith.constant 0 : index
    %c0_15 = arith.constant 0 : index
    %17 = vector.load %arg6[%c0_14, %c0_15] : memref<32x1xf32, #tpu.memory_space<vmem>>, vector<32x1xf32>
    %cst_16 = arith.constant dense<0.000000e+00> : vector<128x1xf32>
    %18 = tpu.matmul %14, %17, %cst_16 {dimension_numbers = #tpu.dot_dimension_numbers<[1], [0], [0], [1], [0, 0, 1, 1], [], []>} : vector<128x32xf32>, vector<32x1xf32>, vector<128x1xf32> -> vector<128x1xf32>
    %c0_17 = arith.constant 0 : index
    %c0_18 = arith.constant 0 : index
    %19 = vector.load %arg7[%c0_17, %c0_18] : memref<1x1xf32, #tpu.memory_space<vmem>>, vector<1x1xf32>
    %20 = vector.broadcast %19 : vector<1x1xf32> to vector<128x1xf32>
    %21 = arith.addf %18, %20 : vector<128x1xf32>
    %c0_19 = arith.constant 0 : index
    %c0_20 = arith.constant 0 : index
    %22 = vector.load %arg9[%c0_19, %c0_20] : memref<128x1xf32, #tpu.memory_space<vmem>>, vector<128x1xf32>
    tpu.vector_store %arg9[%c0_19, %c0_20], %21 {strides = array<i32>} : memref<128x1xf32, #tpu.memory_space<vmem>>, vector<128x1xf32>,
    return
  }
  func.func @transform_0(%arg0: i32) -> (i32, i32) {
    %c0_i32 = arith.constant 0 : i32
    %c0_i32_0 = arith.constant 0 : i32
    return %arg0, %c0_i32 : i32, i32
  }
  func.func @transform_1(%arg0: i32) -> (i32, i32) {
    %c0_i32 = arith.constant 0 : i32
    %c0_i32_0 = arith.constant 0 : i32
    %c0_i32_1 = arith.constant 0 : i32
    return %c0_i32, %c0_i32_0 : i32, i32
  }
  func.func @transform_2(%arg0: i32) -> (i32, i32) {
    %c0_i32 = arith.constant 0 : i32
    %c0_i32_0 = arith.constant 0 : i32
    %c0_i32_1 = arith.constant 0 : i32
    return %c0_i32, %c0_i32_0 : i32, i32
  }
  func.func @transform_3(%arg0: i32) -> (i32, i32) {
    %c0_i32 = arith.constant 0 : i32
    %c0_i32_0 = arith.constant 0 : i32
    %c0_i32_1 = arith.constant 0 : i32
    return %c0_i32, %c0_i32_0 : i32, i32
  }
  func.func @transform_4(%arg0: i32) -> (i32, i32) {
    %c0_i32 = arith.constant 0 : i32
    %c0_i32_0 = arith.constant 0 : i32
    %c0_i32_1 = arith.constant 0 : i32
    return %c0_i32, %c0_i32_0 : i32, i32
  }
  func.func @transform_5(%arg0: i32) -> (i32, i32) {
    %c0_i32 = arith.constant 0 : i32
    %c0_i32_0 = arith.constant 0 : i32
    %c0_i32_1 = arith.constant 0 : i32
    return %c0_i32, %c0_i32_0 : i32, i32
  }
  func.func @transform_6(%arg0: i32) -> (i32, i32) {
    %c0_i32 = arith.constant 0 : i32
    %c0_i32_0 = arith.constant 0 : i32
    %c0_i32_1 = arith.constant 0 : i32
    return %c0_i32, %c0_i32_0 : i32, i32
  }
  func.func @transform_7(%arg0: i32) -> (i32, i32) {
    %c0_i32 = arith.constant 0 : i32
    %c0_i32_0 = arith.constant 0 : i32
    return %arg0, %c0_i32 : i32, i32
  }
  func.func @transform_8(%arg0: i32) -> (i32, i32) {
    %c0_i32 = arith.constant 0 : i32
    %c0_i32_0 = arith.constant 0 : i32
    return %arg0, %c0_i32 : i32, i32
  }
}

module attributes {stable_mosaic.version = 11 : i64} {
  func.func @kernel(%arg0: i32, %arg1: memref<128x11xf32, #tpu.memory_space<vmem>>, %arg2: memref<11x32xf32, #tpu.memory_space<vmem>>, %arg3: memref<1x32xf32, #tpu.memory_space<vmem>>, %arg4: memref<32x32xf32, #tpu.memory_space<vmem>>, %arg5: memref<1x32xf32, #tpu.memory_space<vmem>>, %arg6: memref<32x1xf32, #tpu.memory_space<vmem>>, %arg7: memref<1x1xf32, #tpu.memory_space<vmem>>, %arg8: memref<128x32xf32, #tpu.memory_space<vmem>>, %arg9: memref<128x1xf32, #tpu.memory_space<vmem>>) attributes {dimension_semantics = [#tpu.dimension_semantics<parallel>], iteration_bounds = array<i64: 2>, scalar_prefetch = 0 : i64, scratch_operands = 0 : i64, tpu.core_type = #tpu.core_type<tc>, window_params = [{transform_indices = @transform_0, window_bounds = array<i64: 128, 11>}, {pipeline_mode = #tpu.pipeline_mode<synchronous>, transform_indices = @transform_1, window_bounds = array<i64: 11, 32>}, {pipeline_mode = #tpu.pipeline_mode<synchronous>, transform_indices = @transform_2, window_bounds = array<i64: 1, 32>}, {pipeline_mode = #tpu.pipeline_mode<synchronous>, transform_indices = @transform_3, window_bounds = array<i64: 32, 32>}, {pipeline_mode = #tpu.pipeline_mode<synchronous>, transform_indices = @transform_4, window_bounds = array<i64: 1, 32>}, {pipeline_mode = #tpu.pipeline_mode<synchronous>, transform_indices = @transform_5, window_bounds = array<i64: 32, 1>}, {pipeline_mode = #tpu.pipeline_mode<synchronous>, transform_indices = @transform_6, window_bounds = array<i64: 1, 1>}, {transform_indices = @transform_7, window_bounds = array<i64: 128, 32>}, {transform_indices = @transform_8, window_bounds = array<i64: 128, 1>}]} {
    %c0 = arith.constant 0 : index
    %c0_0 = arith.constant 0 : index
    %0 = vector.load %arg1[%c0, %c0_0] : memref<128x11xf32, #tpu.memory_space<vmem>>, vector<128x11xf32>
    %c0_1 = arith.constant 0 : index
    %c0_2 = arith.constant 0 : index
    %1 = vector.load %arg2[%c0_1, %c0_2] : memref<11x32xf32, #tpu.memory_space<vmem>>, vector<11x32xf32>
    %cst = arith.constant dense<0.000000e+00> : vector<128x32xf32>
    %2 = tpu.matmul %0, %1, %cst {dimension_numbers = #tpu.dot_dimension_numbers<[1], [0], [0], [1], [0, 0, 1, 1], [], []>} : vector<128x11xf32>, vector<11x32xf32>, vector<128x32xf32> -> vector<128x32xf32>
    %c0_3 = arith.constant 0 : index
    %c0_4 = arith.constant 0 : index
    %3 = vector.load %arg3[%c0_3, %c0_4] : memref<1x32xf32, #tpu.memory_space<vmem>>, vector<1x32xf32>
    %4 = vector.broadcast %3 : vector<1x32xf32> to vector<128x32xf32>
    %5 = arith.addf %2, %4 : vector<128x32xf32>
    %cst_5 = arith.constant 0.000000e+00 : f32
    %6 = vector.broadcast %cst_5 : f32 to vector<128x32xf32>
    %7 = arith.maximumf %5, %6 : vector<128x32xf32>
    %c0_6 = arith.constant 0 : index
    %c0_7 = arith.constant 0 : index
    %8 = vector.load %arg4[%c0_6, %c0_7] : memref<32x32xf32, #tpu.memory_space<vmem>>, vector<32x32xf32>
    %cst_8 = arith.constant dense<0.000000e+00> : vector<128x32xf32>
    %9 = tpu.matmul %7, %8, %cst_8 {dimension_numbers = #tpu.dot_dimension_numbers<[1], [0], [0], [1], [0, 0, 1, 1], [], []>} : vector<128x32xf32>, vector<32x32xf32>, vector<128x32xf32> -> vector<128x32xf32>
    %c0_9 = arith.constant 0 : index
    %c0_10 = arith.constant 0 : index
    %10 = vector.load %arg5[%c0_9, %c0_10] : memref<1x32xf32, #tpu.memory_space<vmem>>, vector<1x32xf32>
    %11 = vector.broadcast %10 : vector<1x32xf32> to vector<128x32xf32>
    %12 = arith.addf %9, %11 : vector<128x32xf32>
    %cst_11 = arith.constant 0.000000e+00 : f32
    %13 = vector.broadcast %cst_11 : f32 to vector<128x32xf32>
    %14 = arith.maximumf %12, %13 : vector<128x32xf32>
    %c0_12 = arith.constant 0 : index
    %c0_13 = arith.constant 0 : index
    %15 = vector.load %arg8[%c0_12, %c0_13] : memref<128x32xf32, #tpu.memory_space<vmem>>, vector<128x32xf32>
    tpu.vector_store %arg8[%c0_12, %c0_13], %14 {strides = array<i32>} : memref<128x32xf32, #tpu.memory_space<vmem>>, vector<128x32xf32>,
    %c0_14 = arith.constant 0 : index
    %c0_15 = arith.constant 0 : index
    %16 = vector.load %arg6[%c0_14, %c0_15] : memref<32x1xf32, #tpu.memory_space<vmem>>, vector<32x1xf32>
    %cst_16 = arith.constant dense<0.000000e+00> : vector<128x1xf32>
    %17 = tpu.matmul %14, %16, %cst_16 {dimension_numbers = #tpu.dot_dimension_numbers<[1], [0], [0], [1], [0, 0, 1, 1], [], []>} : vector<128x32xf32>, vector<32x1xf32>, vector<128x1xf32> -> vector<128x1xf32>
    %c0_17 = arith.constant 0 : index
    %c0_18 = arith.constant 0 : index
    %18 = vector.load %arg7[%c0_17, %c0_18] : memref<1x1xf32, #tpu.memory_space<vmem>>, vector<1x1xf32>
    %19 = vector.broadcast %18 : vector<1x1xf32> to vector<128x1xf32>
    %20 = arith.addf %17, %19 : vector<128x1xf32>
    %c0_19 = arith.constant 0 : index
    %c0_20 = arith.constant 0 : index
    %21 = vector.load %arg9[%c0_19, %c0_20] : memref<128x1xf32, #tpu.memory_space<vmem>>, vector<128x1xf32>
    tpu.vector_store %arg9[%c0_19, %c0_20], %20 {strides = array<i32>} : memref<128x1xf32, #tpu.memory_space<vmem>>, vector<128x1xf32>,
    return
  }
  func.func @transform_0(%arg0: i32) -> (i32, i32) {
    %c0_i32 = arith.constant 0 : i32
    %c0_i32_0 = arith.constant 0 : i32
    return %arg0, %c0_i32 : i32, i32
  }
  func.func @transform_1(%arg0: i32) -> (i32, i32) {
    %c0_i32 = arith.constant 0 : i32
    %c0_i32_0 = arith.constant 0 : i32
    %c0_i32_1 = arith.constant 0 : i32
    return %c0_i32, %c0_i32_0 : i32, i32
  }
  func.func @transform_2(%arg0: i32) -> (i32, i32) {
    %c0_i32 = arith.constant 0 : i32
    %c0_i32_0 = arith.constant 0 : i32
    %c0_i32_1 = arith.constant 0 : i32
    return %c0_i32, %c0_i32_0 : i32, i32
  }
  func.func @transform_3(%arg0: i32) -> (i32, i32) {
    %c0_i32 = arith.constant 0 : i32
    %c0_i32_0 = arith.constant 0 : i32
    %c0_i32_1 = arith.constant 0 : i32
    return %c0_i32, %c0_i32_0 : i32, i32
  }
  func.func @transform_4(%arg0: i32) -> (i32, i32) {
    %c0_i32 = arith.constant 0 : i32
    %c0_i32_0 = arith.constant 0 : i32
    %c0_i32_1 = arith.constant 0 : i32
    return %c0_i32, %c0_i32_0 : i32, i32
  }
  func.func @transform_5(%arg0: i32) -> (i32, i32) {
    %c0_i32 = arith.constant 0 : i32
    %c0_i32_0 = arith.constant 0 : i32
    %c0_i32_1 = arith.constant 0 : i32
    return %c0_i32, %c0_i32_0 : i32, i32
  }
  func.func @transform_6(%arg0: i32) -> (i32, i32) {
    %c0_i32 = arith.constant 0 : i32
    %c0_i32_0 = arith.constant 0 : i32
    %c0_i32_1 = arith.constant 0 : i32
    return %c0_i32, %c0_i32_0 : i32, i32
  }
  func.func @transform_7(%arg0: i32) -> (i32, i32) {
    %c0_i32 = arith.constant 0 : i32
    %c0_i32_0 = arith.constant 0 : i32
    return %arg0, %c0_i32 : i32, i32
  }
  func.func @transform_8(%arg0: i32) -> (i32, i32) {
    %c0_i32 = arith.constant 0 : i32
    %c0_i32_0 = arith.constant 0 : i32
    return %arg0, %c0_i32 : i32, i32
  }
}

</mosaic_0001>

<llo_original>
// kernel: tpu_custom_call.1
$region0: #{tpu_custom_call.1}
  #allocation0 [shape = 'u32[]', space=smem, size = 0x4, offset = 0x4, fixed_abs, tag = 'smem constant byte address 0x4 - core index']
  #allocation1 [shape = 'u32[144,128]{1,0:T(1,128)}', space=vmem, size = 0x12000, scoped, tag = 'internal scratch']
  #allocation2 [shape = 'f32[1,1]{1,0:T(1,128)S(1)}', space=vmem, size = 0x200, scoped, tag = 'scoped memory for tpu_custom_call.1']
  %s0 = inlined_call_operand.vmem [shape: f32[256,11], index: 0, kind: input, shape index: {}]
  %s1 = inlined_call_operand.vmem [shape: f32[11,32], index: 1, kind: input, shape index: {}]
  %s2 = inlined_call_operand.vmem [shape: f32[1,32], index: 2, kind: input, shape index: {}]
  %s3 = inlined_call_operand.vmem [shape: f32[32,32], index: 3, kind: input, shape index: {}]
  %s4 = inlined_call_operand.vmem [shape: f32[1,32], index: 4, kind: input, shape index: {}]
  %s5 = inlined_call_operand.vmem [shape: f32[32,1], index: 5, kind: input, shape index: {}]
  %s6 = inlined_call_operand.<no memory space> [shape: f32[1,1], index: 6, kind: input, shape index: {}]
  %s7 = inlined_call_operand.vmem [shape: f32[256,32], index: 7, kind: output, shape index: {0}]
  %s8 = inlined_call_operand.vmem [shape: f32[256,1], index: 8, kind: output, shape index: {1}]
  %9 = xla_tuple %s7, %s8
  %s10 = sld [smem:[#allocation0]]
  $region69: #{tpu_custom_call.1} parent=0
    _
  %s12 = ssub.s32 1, %s10
  %s13 = scalar_select 0, %s12, %s10
  %v14 = vstv %s6
  %15 = vst [vmem:[#allocation2] sm:$0x1] %v14
  loop: start=0, step=1, limit=4
  $region2: #{tpu_custom_call.1} parent=0 // loop_pre_header
    _
  $region3: #{tpu_custom_call.1} parent=0 // loop_header
    %s17 = sphi 0, %s21
    %p18 = scmp.ge.s32.totalorder %s17, 4
    %s27 = sphi 0, %s29
    %s30 = sphi 0, %s27
    %s31 = sphi 0, %s30
    %s47 = sphi 0, %s31
    %s51 = sphi 0, %s51
    %s53 = sphi 0, %s51
    %s54 = sphi 0, %s53
    %s68 = sphi 0, %s54
    %s72 = sphi 0, %s72
    %s74 = sphi 0, %s72
    %s75 = sphi 0, %s74
    %s89 = sphi 0, %s75
    %s93 = sphi 0, %s93
    %s95 = sphi 0, %s93
    %s96 = sphi 0, %s95
    %s110 = sphi 0, %s96
    %s114 = sphi 0, %s114
    %s116 = sphi 0, %s114
    %s117 = sphi 0, %s116
    %s131 = sphi 0, %s117
    %s135 = sphi 0, %s135
    %s137 = sphi 0, %s135
    %s138 = sphi 0, %s137
    %s152 = sphi 0, %s138
    %s156 = sphi 0, %s156
    %s158 = sphi 0, %s156
    %s159 = sphi 0, %s158
    %s173 = sphi 0, %s159
    %s179 = sphi 0, %s181
    %s182 = sphi 0, %s179
    %s183 = sphi 0, %s182
    %s199 = sphi 0, %s183
    %s205 = sphi 0, %s207
    %s208 = sphi 0, %s205
    %s209 = sphi 0, %s208
    %s225 = sphi 0, %s209
  $region4: #{tpu_custom_call.1} parent=0 // loop_header_branch
    %20 = sbr.rel (%p18) target = $region8
  $region5: #{tpu_custom_call.1} parent=0 // loop_body
    %s22 = ssub.s32 %s17, 1
    %s23 = ssub.s32 %s17, 2
    %s24 = sadd.s32 %s17, 1
    %s25 = ssub.s32 %s17, %s24
    %p26 = scmp.eq.s32.totalorder %s25, 0
    %s28 = sadd.s32 %s27, 1
    %s29 = scalar_select %p26, %s27, %s28
    %p32 = pneg %p26
    %p33 = scmp.eq.s32.totalorder %s17, 1
    %p34 = por %p32, %p33
    %p35 = scmp.ne.s32.totalorder %s27, %s30
    %p36 = scmp.eq.s32.totalorder %s17, 0
    %p37 = por %p35, %p36
    %p38 = scmp.ne.s32.totalorder %s27, %s30
    %p39 = scmp.eq.s32.totalorder %s22, 1
    %p40 = por %p38, %p39
    %p41 = scmp.ne.s32.totalorder %s30, %s31
    %p42 = scmp.eq.s32.totalorder %s22, 0
    %p43 = por %p41, %p42
    %p44 = scmp.ne.s32.totalorder %s30, %s31
    %p45 = scmp.eq.s32.totalorder %s23, 1
    %p46 = por %p44, %p45
    %p48 = scmp.ne.s32.totalorder %s31, %s47
    %p49 = scmp.eq.s32.totalorder %s23, 0
    %p50 = por %p48, %p49
    %s52 = sadd.s32 %s51, 1
    %p55 = scmp.eq.s32.totalorder %s17, 1
    %p56 = scmp.ne.s32.totalorder %s51, %s53
    %p57 = scmp.eq.s32.totalorder %s17, 0
    %p58 = por %p56, %p57
    %p59 = scmp.ne.s32.totalorder %s51, %s53
    %p60 = scmp.eq.s32.totalorder %s22, 1
    %p61 = por %p59, %p60
    %p62 = scmp.ne.s32.totalorder %s53, %s54
    %p63 = scmp.eq.s32.totalorder %s22, 0
    %p64 = por %p62, %p63
    %p65 = scmp.ne.s32.totalorder %s53, %s54
    %p66 = scmp.eq.s32.totalorder %s23, 1
    %p67 = por %p65, %p66
    %p69 = scmp.ne.s32.totalorder %s54, %s68
    %p70 = scmp.eq.s32.totalorder %s23, 0
    %p71 = por %p69, %p70
    %s73 = sadd.s32 %s72, 1
    %p76 = scmp.eq.s32.totalorder %s17, 1
    %p77 = scmp.ne.s32.totalorder %s72, %s74
    %p78 = scmp.eq.s32.totalorder %s17, 0
    %p79 = por %p77, %p78
    %p80 = scmp.ne.s32.totalorder %s72, %s74
    %p81 = scmp.eq.s32.totalorder %s22, 1
    %p82 = por %p80, %p81
    %p83 = scmp.ne.s32.totalorder %s74, %s75
    %p84 = scmp.eq.s32.totalorder %s22, 0
    %p85 = por %p83, %p84
    %p86 = scmp.ne.s32.totalorder %s74, %s75
    %p87 = scmp.eq.s32.totalorder %s23, 1
    %p88 = por %p86, %p87
    %p90 = scmp.ne.s32.totalorder %s75, %s89
    %p91 = scmp.eq.s32.totalorder %s23, 0
    %p92 = por %p90, %p91
    %s94 = sadd.s32 %s93, 1
    %p97 = scmp.eq.s32.totalorder %s17, 1
    %p98 = scmp.ne.s32.totalorder %s93, %s95
    %p99 = scmp.eq.s32.totalorder %s17, 0
    %p100 = por %p98, %p99
    %p101 = scmp.ne.s32.totalorder %s93, %s95
    %p102 = scmp.eq.s32.totalorder %s22, 1
    %p103 = por %p101, %p102
    %p104 = scmp.ne.s32.totalorder %s95, %s96
    %p105 = scmp.eq.s32.totalorder %s22, 0
    %p106 = por %p104, %p105
    %p107 = scmp.ne.s32.totalorder %s95, %s96
    %p108 = scmp.eq.s32.totalorder %s23, 1
    %p109 = por %p107, %p108
    %p111 = scmp.ne.s32.totalorder %s96, %s110
    %p112 = scmp.eq.s32.totalorder %s23, 0
    %p113 = por %p111, %p112
    %s115 = sadd.s32 %s114, 1
    %p118 = scmp.eq.s32.totalorder %s17, 1
    %p119 = scmp.ne.s32.totalorder %s114, %s116
    %p120 = scmp.eq.s32.totalorder %s17, 0
    %p121 = por %p119, %p120
    %p122 = scmp.ne.s32.totalorder %s114, %s116
    %p123 = scmp.eq.s32.totalorder %s22, 1
    %p124 = por %p122, %p123
    %p125 = scmp.ne.s32.totalorder %s116, %s117
    %p126 = scmp.eq.s32.totalorder %s22, 0
    %p127 = por %p125, %p126
    %p128 = scmp.ne.s32.totalorder %s116, %s117
    %p129 = scmp.eq.s32.totalorder %s23, 1
    %p130 = por %p128, %p129
    %p132 = scmp.ne.s32.totalorder %s117, %s131
    %p133 = scmp.eq.s32.totalorder %s23, 0
    %p134 = por %p132, %p133
    %s136 = sadd.s32 %s135, 1
    %p139 = scmp.eq.s32.totalorder %s17, 1
    %p140 = scmp.ne.s32.totalorder %s135, %s137
    %p141 = scmp.eq.s32.totalorder %s17, 0
    %p142 = por %p140, %p141
    %p143 = scmp.ne.s32.totalorder %s135, %s137
    %p144 = scmp.eq.s32.totalorder %s22, 1
    %p145 = por %p143, %p144
    %p146 = scmp.ne.s32.totalorder %s137, %s138
    %p147 = scmp.eq.s32.totalorder %s22, 0
    %p148 = por %p146, %p147
    %p149 = scmp.ne.s32.totalorder %s137, %s138
    %p150 = scmp.eq.s32.totalorder %s23, 1
    %p151 = por %p149, %p150
    %p153 = scmp.ne.s32.totalorder %s138, %s152
    %p154 = scmp.eq.s32.totalorder %s23, 0
    %p155 = por %p153, %p154
    %s157 = sadd.s32 %s156, 1
    %p160 = scmp.eq.s32.totalorder %s17, 1
    %p161 = scmp.ne.s32.totalorder %s156, %s158
    %p162 = scmp.eq.s32.totalorder %s17, 0
    %p163 = por %p161, %p162
    %p164 = scmp.ne.s32.totalorder %s156, %s158
    %p165 = scmp.eq.s32.totalorder %s22, 1
    %p166 = por %p164, %p165
    %p167 = scmp.ne.s32.totalorder %s158, %s159
    %p168 = scmp.eq.s32.totalorder %s22, 0
    %p169 = por %p167, %p168
    %p170 = scmp.ne.s32.totalorder %s158, %s159
    %p171 = scmp.eq.s32.totalorder %s23, 1
    %p172 = por %p170, %p171
    %p174 = scmp.ne.s32.totalorder %s159, %s173
    %p175 = scmp.eq.s32.totalorder %s23, 0
    %p176 = por %p174, %p175
    %s177 = ssub.s32 %s17, %s24
    %p178 = scmp.eq.s32.totalorder %s177, 0
    %s180 = sadd.s32 %s179, 1
    %s181 = scalar_select %p178, %s179, %s180
    %p184 = pneg %p178
    %p185 = scmp.eq.s32.totalorder %s17, 1
    %p186 = por %p184, %p185
    %p187 = scmp.ne.s32.totalorder %s179, %s182
    %p188 = scmp.eq.s32.totalorder %s17, 0
    %p189 = por %p187, %p188
    %p190 = scmp.ne.s32.totalorder %s179, %s182
    %p191 = scmp.eq.s32.totalorder %s22, 1
    %p192 = por %p190, %p191
    %p193 = scmp.ne.s32.totalorder %s182, %s183
    %p194 = scmp.eq.s32.totalorder %s22, 0
    %p195 = por %p193, %p194
    %p196 = scmp.ne.s32.totalorder %s182, %s183
    %p197 = scmp.eq.s32.totalorder %s23, 1
    %p198 = por %p196, %p197
    %p200 = scmp.ne.s32.totalorder %s183, %s199
    %p201 = scmp.eq.s32.totalorder %s23, 0
    %p202 = por %p200, %p201
    %s203 = ssub.s32 %s17, %s24
    %p204 = scmp.eq.s32.totalorder %s203, 0
    %s206 = sadd.s32 %s205, 1
    %s207 = scalar_select %p204, %s205, %s206
    %p210 = pneg %p204
    %p211 = scmp.eq.s32.totalorder %s17, 1
    %p212 = por %p210, %p211
    %p213 = scmp.ne.s32.totalorder %s205, %s208
    %p214 = scmp.eq.s32.totalorder %s17, 0
    %p215 = por %p213, %p214
    %p216 = scmp.ne.s32.totalorder %s205, %s208
    %p217 = scmp.eq.s32.totalorder %s22, 1
    %p218 = por %p216, %p217
    %p219 = scmp.ne.s32.totalorder %s208, %s209
    %p220 = scmp.eq.s32.totalorder %s22, 0
    %p221 = por %p219, %p220
    %p222 = scmp.ne.s32.totalorder %s208, %s209
    %p223 = scmp.eq.s32.totalorder %s23, 1
    %p224 = por %p222, %p223
    %p226 = scmp.ne.s32.totalorder %s209, %s225
    %p227 = scmp.eq.s32.totalorder %s23, 0
    %p228 = por %p226, %p227
    %p229 = scmp.le.s32.totalorder 1, %s17
    %p230 = scmp.lt.s32.totalorder %s17, 3
    %p231 = pnand %p229, %p230
    %p232 = pneg %p231
    // Predicated region
    $region9: #{tpu_custom_call.1} parent=5 // pred_check
      _
    $region10: #{tpu_custom_call.1} parent=5 // pred_check_branch
      %234 = sbr.rel (%p231) target = $region12
    $region11: #{tpu_custom_call.1} parent=5 // pred_region
      %s235 = ssub.s32 %s17, 1
      // Predicated region
      $region13: #{tpu_custom_call.1} parent=11 // pred_check
        %p236 = pneg %p64
      $region14: #{tpu_custom_call.1} parent=11 // pred_check_branch
        %238 = sbr.rel (%p236) target = $region16
      $region15: #{tpu_custom_call.1} parent=11 // pred_region
        _
      $region16: #{tpu_custom_call.1} parent=11 // pred_fallthru
        _
      // Predicated region
      $region17: #{tpu_custom_call.1} parent=11 // pred_check
        %p239 = pneg %p85
      $region18: #{tpu_custom_call.1} parent=11 // pred_check_branch
        %241 = sbr.rel (%p239) target = $region20
      $region19: #{tpu_custom_call.1} parent=11 // pred_region
        _
      $region20: #{tpu_custom_call.1} parent=11 // pred_fallthru
        _
      // Predicated region
      $region21: #{tpu_custom_call.1} parent=11 // pred_check
        %p242 = pneg %p106
      $region22: #{tpu_custom_call.1} parent=11 // pred_check_branch
        %244 = sbr.rel (%p242) target = $region24
      $region23: #{tpu_custom_call.1} parent=11 // pred_region
        _
      $region24: #{tpu_custom_call.1} parent=11 // pred_fallthru
        _
      // Predicated region
      $region25: #{tpu_custom_call.1} parent=11 // pred_check
        %p245 = pneg %p127
      $region26: #{tpu_custom_call.1} parent=11 // pred_check_branch
        %247 = sbr.rel (%p245) target = $region28
      $region27: #{tpu_custom_call.1} parent=11 // pred_region
        _
      $region28: #{tpu_custom_call.1} parent=11 // pred_fallthru
        _
      // Predicated region
      $region29: #{tpu_custom_call.1} parent=11 // pred_check
        %p248 = pneg %p148
      $region30: #{tpu_custom_call.1} parent=11 // pred_check_branch
        %250 = sbr.rel (%p248) target = $region32
      $region31: #{tpu_custom_call.1} parent=11 // pred_region
        _
      $region32: #{tpu_custom_call.1} parent=11 // pred_fallthru
        _
      // Predicated region
      $region33: #{tpu_custom_call.1} parent=11 // pred_check
        %p251 = pneg %p169
      $region34: #{tpu_custom_call.1} parent=11 // pred_check_branch
        %253 = sbr.rel (%p251) target = $region36
      $region35: #{tpu_custom_call.1} parent=11 // pred_region
        _
      $region36: #{tpu_custom_call.1} parent=11 // pred_fallthru
        _
    $region12: #{tpu_custom_call.1} parent=5 // pred_fallthru
      _
    %p254 = scmp.lt.s32.totalorder %s17, 2
    // Predicated region
    $region37: #{tpu_custom_call.1} parent=5 // pred_check
      %p255 = pneg %p254
    $region38: #{tpu_custom_call.1} parent=5 // pred_check_branch
      %257 = sbr.rel (%p255) target = $region40
    $region39: #{tpu_custom_call.1} parent=5 // pred_region
      // Predicated region
      $region41: #{tpu_custom_call.1} parent=39 // pred_check
        %p258 = pneg %p37
      $region42: #{tpu_custom_call.1} parent=39 // pred_check_branch
        %260 = sbr.rel (%p258) target = $region44
      $region43: #{tpu_custom_call.1} parent=39 // pred_region
        %s261 = smul.u32 16, %s17
        %p262 = scmp.lt.s32.totalorder %s261, 31
        %s263 = scalar_select %p262, %s261, 31
        %s264 = smul.addr %s263, 8
        %s265 = scalar_lea.vmem %s0, %s264
        %s266 = smul.u32 16, %s17
      $region44: #{tpu_custom_call.1} parent=39 // pred_fallthru
        _
    $region40: #{tpu_custom_call.1} parent=5 // pred_fallthru
      _
    %p267 = scmp.le.s32.totalorder 1, %s17
    %p268 = scmp.lt.s32.totalorder %s17, 3
    %p269 = pnand %p267, %p268
    %p270 = pneg %p269
    // Predicated region
    $region45: #{tpu_custom_call.1} parent=5 // pred_check
      _
    $region46: #{tpu_custom_call.1} parent=5 // pred_check_branch
      %272 = sbr.rel (%p269) target = $region48
    $region47: #{tpu_custom_call.1} parent=5 // pred_region
      %s273 = ssub.s32 %s17, 1
      %s274 = smul.u32 16, %s22
      %p275 = scmp.lt.s32.totalorder %s274, 31
      %s276 = scalar_select %p275, %s274, 31
      %s277 = smul.addr %s276, 8
      %s278 = scalar_lea.vmem %s0, %s277
      %p279 = pneg %p43
      %p280 = pneg %p40
      %p281 = pneg %p64
      %p282 = pneg %p61
      %p283 = pneg %p85
      %p284 = pneg %p82
      %p285 = pneg %p106
      %p286 = pneg %p103
      %p287 = pneg %p127
      %p288 = pneg %p124
      %p289 = pneg %p148
      %p290 = pneg %p145
      %p291 = pneg %p169
      %p292 = pneg %p166
      %p293 = pneg %p195
      %p294 = pneg %p192
      %s295 = smul.u32 16, %s22
      %p296 = scmp.lt.s32.totalorder %s295, 31
      %s297 = scalar_select %p296, %s295, 31
      %s298 = smul.addr %s297, 8
      %s299 = scalar_lea.vmem %s7, %s298
      %p300 = pneg %p221
      %p301 = pneg %p218
      %s302 = smul.u32 16, %s22
      %p303 = scmp.lt.s32.totalorder %s302, 31
      %s304 = scalar_select %p303, %s302, 31
      %s305 = smul.addr %s304, 8
      %s306 = scalar_lea.vmem %s8, %s305
      %s307 = smul.u32 16, %s22
      %p308 = scmp.lt.s32.totalorder %s307, 31
      %s309 = scalar_select %p308, %s307, 31
      %s310 = smul.addr %s309, 8
      %s311 = scalar_lea.vmem %s0, %s310
      %s312 = smul.u32 16, %s22
      %s313 = smul.u32 16, %s22
      %p314 = scmp.lt.s32.totalorder %s313, 31
      %s315 = scalar_select %p314, %s313, 31
      %s316 = smul.addr %s315, 8
      %s317 = scalar_lea.vmem %s7, %s316
      %s318 = smul.u32 16, %s22
      %s319 = smul.u32 16, %s22
      %p320 = scmp.lt.s32.totalorder %s319, 31
      %s321 = scalar_select %p320, %s319, 31
      %s322 = smul.addr %s321, 8
      %s323 = scalar_lea.vmem %s8, %s322
      %s324 = smul.u32 16, %s22
      %v325 = vld [vmem:[%s311] sm:$0xff]
      %v326 = vld [vmem:[%s311 + $0x8] sm:$0xff]
      %v327 = vld [vmem:[%s311 + $0x10] sm:$0xff]
      %v328 = vld [vmem:[%s311 + $0x18] sm:$0xff]
      %v329 = vld [vmem:[%s311 + $0x20] sm:$0xff]
      %v330 = vld [vmem:[%s311 + $0x28] sm:$0xff]
      %v331 = vld [vmem:[%s311 + $0x30] sm:$0xff]
      %v332 = vld [vmem:[%s311 + $0x38] sm:$0xff]
      %v333 = vld [vmem:[%s311 + $0x40] sm:$0xff]
      %v334 = vld [vmem:[%s311 + $0x48] sm:$0xff]
      %v335 = vld [vmem:[%s311 + $0x50] sm:$0xff]
      %v336 = vld [vmem:[%s311 + $0x58] sm:$0xff]
      %v337 = vld [vmem:[%s311 + $0x60] sm:$0xff]
      %v338 = vld [vmem:[%s311 + $0x68] sm:$0xff]
      %v339 = vld [vmem:[%s311 + $0x70] sm:$0xff]
      %v340 = vld [vmem:[%s311 + $0x78] sm:$0xff]
      %v341 = vld [vmem:[%s1] sm:$0xff]
      %v342 = vld [vmem:[%s1 + $0x8] sm:$0x7]
      %v343 = vld [vmem:[%s2] sm:$0x1]
      %v345 = vlaneseq
      %v346 = vshrl.u32 %v345, 7
      %v347 = vsub.s32 0, %v346
      %v348 = vrot.slane %v343, %v347
      %vm350 = vcmask 89088
      %v352 = vsel %vm350, %v325, 0
      %v355 = vsel %vm350, %v326, 0
      %v358 = vsel %vm350, %v327, 0
      %v361 = vsel %vm350, %v328, 0
      %v364 = vsel %vm350, %v329, 0
      %v367 = vsel %vm350, %v330, 0
      %v370 = vsel %vm350, %v331, 0
      %v373 = vsel %vm350, %v332, 0
      %v376 = vsel %vm350, %v333, 0
      %v379 = vsel %vm350, %v334, 0
      %v382 = vsel %vm350, %v335, 0
      %v385 = vsel %vm350, %v336, 0
      %v388 = vsel %vm350, %v337, 0
      %v391 = vsel %vm350, %v338, 0
      %v394 = vsel %vm350, %v339, 0
      %v397 = vsel %vm350, %v340, 0
      %vm399 = vcmask 1042432
      %v401 = vsel %vm399, %v342, 0
      %403 = vmatprep.subr.mxu0 0.0
      %404 = vmatpush1.msra.mxu0 %v341
      %405 = vmatprep.subr.mxu0 0.0
      %406 = vmatpush1.msra.mxu0 %v401
      %407 = vmatprep.subr.mxu0 0.0
      %408 = vmatpush1.msra.mxu0 0.0
      %409 = vmatprep.subr.mxu0 0.0
      %410 = vmatpush1.msra.mxu0 0.0
      %411 = vmatprep.subr.mxu0 0.0
      %412 = vmatpush1.msra.mxu0 0.0
      %413 = vmatprep.subr.mxu0 0.0
      %414 = vmatpush1.msra.mxu0 0.0
      %415 = vmatprep.subr.mxu0 0.0
      %416 = vmatpush1.msra.mxu0 0.0
      %417 = vmatprep.subr.mxu0 0.0
      %418 = vmatpush1.msra.mxu0 0.0
      %419 = vmatprep.subr.mxu0 0.0
      %420 = vmatpush1.msra.mxu0 0.0
      %421 = vmatprep.subr.mxu0 0.0
      %422 = vmatpush1.msra.mxu0 0.0
      %423 = vmatprep.subr.mxu0 0.0
      %424 = vmatpush1.msra.mxu0 0.0
      %425 = vmatprep.subr.mxu0 0.0
      %426 = vmatpush1.msra.mxu0 0.0
      %427 = vmatprep.subr.mxu0 0.0
      %428 = vmatpush1.msra.mxu0 0.0
      %429 = vmatprep.subr.mxu0 0.0
      %430 = vmatpush1.msra.mxu0 0.0
      %431 = vmatprep.subr.mxu0 0.0
      %432 = vmatpush1.msra.mxu0 0.0
      %433 = vmatprep.subr.mxu0 0.0
      %434 = vmatpush1.msra.mxu0 0.0
      %435 = vmatprep.subr.mxu0 0.0
      %436 = vmatpush1.msra.mxu0 0.0
      %437 = vmatprep.subr.mxu0 0.0
      %438 = vmatpush1.msra.mxu0 0.0
      %439 = vmatprep.subr.mxu0 0.0
      %440 = vmatpush1.msra.mxu0 0.0
      %441 = vmatprep.subr.mxu0 0.0
      %442 = vmatpush1.msra.mxu0 0.0
      %443 = vmatprep.subr.mxu0 0.0
      %444 = vmatpush1.msra.mxu0 0.0
      %445 = vmatprep.subr.mxu0 0.0
      %446 = vmatpush1.msra.mxu0 0.0
      %447 = vmatprep.subr.mxu0 0.0
      %448 = vmatpush1.msra.mxu0 0.0
      %449 = vmatprep.subr.mxu0 0.0
      %450 = vmatpush1.msra.mxu0 0.0
      %451 = vmatprep.subr.mxu0 0.0
      %452 = vmatpush1.msra.mxu0 0.0
      %453 = vmatprep.subr.mxu0 0.0
      %454 = vmatpush1.msra.mxu0 0.0
      %455 = vmatprep.subr.mxu0 0.0
      %456 = vmatpush1.msra.mxu0 0.0
      %457 = vmatprep.subr.mxu0 0.0
      %458 = vmatpush1.msra.mxu0 0.0
      %459 = vmatprep.subr.mxu0 0.0
      %460 = vmatpush1.msra.mxu0 0.0
      %461 = vmatprep.subr.mxu0 0.0
      %462 = vmatpush1.msra.mxu0 0.0
      %463 = vmatprep.subr.mxu0 0.0
      %464 = vmatpush1.msra.mxu0 0.0
      %465 = vmatprep.subr.mxu0 0.0
      %466 = vmatpush1.msra.mxu0 0.0
      %467 = vmatprep.mubr.f32.mxu0 0.0
      %468 = vmatmul.mubr.f32.gmra.mrb[0].mxu0 %v352
      %v469 = vpop.f32.mrb[0].mxu0
      %v470 = vadd.f32 %v348, %v469
      %v471 = vpop.f32.mrb[0].mxu0
      %472 = vmatprep.mubr.f32.mxu0 0.0
      %473 = vmatmul.mubr.f32.gmra.mrb[0].mxu0 %v355
      %v474 = vpop.f32.mrb[0].mxu0
      %v475 = vadd.f32 %v348, %v474
      %v476 = vpop.f32.mrb[0].mxu0
      %477 = vmatprep.mubr.f32.mxu0 0.0
      %478 = vmatmul.mubr.f32.gmra.mrb[0].mxu0 %v358
      %v479 = vpop.f32.mrb[0].mxu0
      %v480 = vadd.f32 %v348, %v479
      %v481 = vpop.f32.mrb[0].mxu0
      %482 = vmatprep.mubr.f32.mxu0 0.0
      %483 = vmatmul.mubr.f32.gmra.mrb[0].mxu0 %v361
      %v484 = vpop.f32.mrb[0].mxu0
      %v485 = vadd.f32 %v348, %v484
      %v486 = vpop.f32.mrb[0].mxu0
      %487 = vmatprep.mubr.f32.mxu0 0.0
      %488 = vmatmul.mubr.f32.gmra.mrb[0].mxu0 %v364
      %v489 = vpop.f32.mrb[0].mxu0
      %v490 = vadd.f32 %v348, %v489
      %v491 = vpop.f32.mrb[0].mxu0
      %492 = vmatprep.mubr.f32.mxu0 0.0
      %493 = vmatmul.mubr.f32.gmra.mrb[0].mxu0 %v367
      %v494 = vpop.f32.mrb[0].mxu0
      %v495 = vadd.f32 %v348, %v494
      %v496 = vpop.f32.mrb[0].mxu0
      %497 = vmatprep.mubr.f32.mxu0 0.0
      %498 = vmatmul.mubr.f32.gmra.mrb[0].mxu0 %v370
      %v499 = vpop.f32.mrb[0].mxu0
      %v500 = vadd.f32 %v348, %v499
      %v501 = vpop.f32.mrb[0].mxu0
      %502 = vmatprep.mubr.f32.mxu0 0.0
      %503 = vmatmul.mubr.f32.gmra.mrb[0].mxu0 %v373
      %v504 = vpop.f32.mrb[0].mxu0
      %v505 = vadd.f32 %v348, %v504
      %v506 = vpop.f32.mrb[0].mxu0
      %507 = vmatprep.mubr.f32.mxu0 0.0
      %508 = vmatmul.mubr.f32.gmra.mrb[0].mxu0 %v376
      %v509 = vpop.f32.mrb[0].mxu0
      %v510 = vadd.f32 %v348, %v509
      %v511 = vpop.f32.mrb[0].mxu0
      %512 = vmatprep.mubr.f32.mxu0 0.0
      %513 = vmatmul.mubr.f32.gmra.mrb[0].mxu0 %v379
      %v514 = vpop.f32.mrb[0].mxu0
      %v515 = vadd.f32 %v348, %v514
      %v516 = vpop.f32.mrb[0].mxu0
      %517 = vmatprep.mubr.f32.mxu0 0.0
      %518 = vmatmul.mubr.f32.gmra.mrb[0].mxu0 %v382
      %v519 = vpop.f32.mrb[0].mxu0
      %v520 = vadd.f32 %v348, %v519
      %v521 = vpop.f32.mrb[0].mxu0
      %522 = vmatprep.mubr.f32.mxu0 0.0
      %523 = vmatmul.mubr.f32.gmra.mrb[0].mxu0 %v385
      %v524 = vpop.f32.mrb[0].mxu0
      %v525 = vadd.f32 %v348, %v524
      %v526 = vpop.f32.mrb[0].mxu0
      %527 = vmatprep.mubr.f32.mxu0 0.0
      %528 = vmatmul.mubr.f32.gmra.mrb[0].mxu0 %v388
      %v529 = vpop.f32.mrb[0].mxu0
      %v530 = vadd.f32 %v348, %v529
      %v531 = vpop.f32.mrb[0].mxu0
      %532 = vmatprep.mubr.f32.mxu0 0.0
      %533 = vmatmul.mubr.f32.gmra.mrb[0].mxu0 %v391
      %v534 = vpop.f32.mrb[0].mxu0
      %v535 = vadd.f32 %v348, %v534
      %v536 = vpop.f32.mrb[0].mxu0
      %537 = vmatprep.mubr.f32.mxu0 0.0
      %538 = vmatmul.mubr.f32.gmra.mrb[0].mxu0 %v394
      %v539 = vpop.f32.mrb[0].mxu0
      %v540 = vadd.f32 %v348, %v539
      %v541 = vpop.f32.mrb[0].mxu0
      %542 = vmatprep.mubr.f32.mxu0 0.0
      %543 = vmatmul.mubr.f32.gmra.mrb[0].mxu0 %v397
      %v544 = vpop.f32.mrb[0].mxu0
      %v545 = vadd.f32 %v348, %v544
      %v546 = vpop.f32.mrb[0].mxu0
      %547 = vdwg.mxu0
      %v548 = vmax.f32 %v470, 0.0
      %v549 = vmax.f32 %v475, 0.0
      %v550 = vmax.f32 %v480, 0.0
      %v551 = vmax.f32 %v485, 0.0
      %v552 = vmax.f32 %v490, 0.0
      %v553 = vmax.f32 %v495, 0.0
      %v554 = vmax.f32 %v500, 0.0
      %v555 = vmax.f32 %v505, 0.0
      %v556 = vmax.f32 %v510, 0.0
      %v557 = vmax.f32 %v515, 0.0
      %v558 = vmax.f32 %v520, 0.0
      %v559 = vmax.f32 %v525, 0.0
      %v560 = vmax.f32 %v530, 0.0
      %v561 = vmax.f32 %v535, 0.0
      %v562 = vmax.f32 %v540, 0.0
      %v563 = vmax.f32 %v545, 0.0
      %v564 = vld [vmem:[%s3] sm:$0xff]
      %v565 = vld [vmem:[%s3 + $0x8] sm:$0xff]
      %v566 = vld [vmem:[%s3 + $0x10] sm:$0xff]
      %v567 = vld [vmem:[%s3 + $0x18] sm:$0xff]
      %v568 = vld [vmem:[%s4] sm:$0x1]
      %v570 = vlaneseq
      %v571 = vshrl.u32 %v570, 7
      %v572 = vsub.s32 0, %v571
      %v573 = vrot.slane %v568, %v572
      %vm575 = vcmask 261120
      %v577 = vsel %vm575, %v548, 0
      %v580 = vsel %vm575, %v549, 0
      %v583 = vsel %vm575, %v550, 0
      %v586 = vsel %vm575, %v551, 0
      %v589 = vsel %vm575, %v552, 0
      %v592 = vsel %vm575, %v553, 0
      %v595 = vsel %vm575, %v554, 0
      %v598 = vsel %vm575, %v555, 0
      %v601 = vsel %vm575, %v556, 0
      %v604 = vsel %vm575, %v557, 0
      %v607 = vsel %vm575, %v558, 0
      %v610 = vsel %vm575, %v559, 0
      %v613 = vsel %vm575, %v560, 0
      %v616 = vsel %vm575, %v561, 0
      %v619 = vsel %vm575, %v562, 0
      %v622 = vsel %vm575, %v563, 0
      %624 = vmatprep.subr.mxu0 0.0
      %625 = vmatpush1.msra.mxu0 %v564
      %626 = vmatprep.subr.mxu0 0.0
      %627 = vmatpush1.msra.mxu0 %v565
      %628 = vmatprep.subr.mxu0 0.0
      %629 = vmatpush1.msra.mxu0 %v566
      %630 = vmatprep.subr.mxu0 0.0
      %631 = vmatpush1.msra.mxu0 %v567
      %632 = vmatprep.subr.mxu0 0.0
      %633 = vmatpush1.msra.mxu0 0.0
      %634 = vmatprep.subr.mxu0 0.0
      %635 = vmatpush1.msra.mxu0 0.0
      %636 = vmatprep.subr.mxu0 0.0
      %637 = vmatpush1.msra.mxu0 0.0
      %638 = vmatprep.subr.mxu0 0.0
      %639 = vmatpush1.msra.mxu0 0.0
      %640 = vmatprep.subr.mxu0 0.0
      %641 = vmatpush1.msra.mxu0 0.0
      %642 = vmatprep.subr.mxu0 0.0
      %643 = vmatpush1.msra.mxu0 0.0
      %644 = vmatprep.subr.mxu0 0.0
      %645 = vmatpush1.msra.mxu0 0.0
      %646 = vmatprep.subr.mxu0 0.0
      %647 = vmatpush1.msra.mxu0 0.0
      %648 = vmatprep.subr.mxu0 0.0
      %649 = vmatpush1.msra.mxu0 0.0
      %650 = vmatprep.subr.mxu0 0.0
      %651 = vmatpush1.msra.mxu0 0.0
      %652 = vmatprep.subr.mxu0 0.0
      %653 = vmatpush1.msra.mxu0 0.0
      %654 = vmatprep.subr.mxu0 0.0
      %655 = vmatpush1.msra.mxu0 0.0
      %656 = vmatprep.subr.mxu0 0.0
      %657 = vmatpush1.msra.mxu0 0.0
      %658 = vmatprep.subr.mxu0 0.0
      %659 = vmatpush1.msra.mxu0 0.0
      %660 = vmatprep.subr.mxu0 0.0
      %661 = vmatpush1.msra.mxu0 0.0
      %662 = vmatprep.subr.mxu0 0.0
      %663 = vmatpush1.msra.mxu0 0.0
      %664 = vmatprep.subr.mxu0 0.0
      %665 = vmatpush1.msra.mxu0 0.0
      %666 = vmatprep.subr.mxu0 0.0
      %667 = vmatpush1.msra.mxu0 0.0
      %668 = vmatprep.subr.mxu0 0.0
      %669 = vmatpush1.msra.mxu0 0.0
      %670 = vmatprep.subr.mxu0 0.0
      %671 = vmatpush1.msra.mxu0 0.0
      %672 = vmatprep.subr.mxu0 0.0
      %673 = vmatpush1.msra.mxu0 0.0
      %674 = vmatprep.subr.mxu0 0.0
      %675 = vmatpush1.msra.mxu0 0.0
      %676 = vmatprep.subr.mxu0 0.0
      %677 = vmatpush1.msra.mxu0 0.0
      %678 = vmatprep.subr.mxu0 0.0
      %679 = vmatpush1.msra.mxu0 0.0
      %680 = vmatprep.subr.mxu0 0.0
      %681 = vmatpush1.msra.mxu0 0.0
      %682 = vmatprep.subr.mxu0 0.0
      %683 = vmatpush1.msra.mxu0 0.0
      %684 = vmatprep.subr.mxu0 0.0
      %685 = vmatpush1.msra.mxu0 0.0
      %686 = vmatprep.subr.mxu0 0.0
      %687 = vmatpush1.msra.mxu0 0.0
      %688 = vmatprep.mubr.f32.mxu0 0.0
      %689 = vmatmul.mubr.f32.gmra.mrb[0].mxu0 %v577
      %v690 = vpop.f32.mrb[0].mxu0
      %v691 = vadd.f32 %v573, %v690
      %v692 = vpop.f32.mrb[0].mxu0
      %693 = vmatprep.mubr.f32.mxu0 0.0
      %694 = vmatmul.mubr.f32.gmra.mrb[0].mxu0 %v580
      %v695 = vpop.f32.mrb[0].mxu0
      %v696 = vadd.f32 %v573, %v695
      %v697 = vpop.f32.mrb[0].mxu0
      %698 = vmatprep.mubr.f32.mxu0 0.0
      %699 = vmatmul.mubr.f32.gmra.mrb[0].mxu0 %v583
      %v700 = vpop.f32.mrb[0].mxu0
      %v701 = vadd.f32 %v573, %v700
      %v702 = vpop.f32.mrb[0].mxu0
      %703 = vmatprep.mubr.f32.mxu0 0.0
      %704 = vmatmul.mubr.f32.gmra.mrb[0].mxu0 %v586
      %v705 = vpop.f32.mrb[0].mxu0
      %v706 = vadd.f32 %v573, %v705
      %v707 = vpop.f32.mrb[0].mxu0
      %708 = vmatprep.mubr.f32.mxu0 0.0
      %709 = vmatmul.mubr.f32.gmra.mrb[0].mxu0 %v589
      %v710 = vpop.f32.mrb[0].mxu0
      %v711 = vadd.f32 %v573, %v710
      %v712 = vpop.f32.mrb[0].mxu0
      %713 = vmatprep.mubr.f32.mxu0 0.0
      %714 = vmatmul.mubr.f32.gmra.mrb[0].mxu0 %v592
      %v715 = vpop.f32.mrb[0].mxu0
      %v716 = vadd.f32 %v573, %v715
      %v717 = vpop.f32.mrb[0].mxu0
      %718 = vmatprep.mubr.f32.mxu0 0.0
      %719 = vmatmul.mubr.f32.gmra.mrb[0].mxu0 %v595
      %v720 = vpop.f32.mrb[0].mxu0
      %v721 = vadd.f32 %v573, %v720
      %v722 = vpop.f32.mrb[0].mxu0
      %723 = vmatprep.mubr.f32.mxu0 0.0
      %724 = vmatmul.mubr.f32.gmra.mrb[0].mxu0 %v598
      %v725 = vpop.f32.mrb[0].mxu0
      %v726 = vadd.f32 %v573, %v725
      %v727 = vpop.f32.mrb[0].mxu0
      %728 = vmatprep.mubr.f32.mxu0 0.0
      %729 = vmatmul.mubr.f32.gmra.mrb[0].mxu0 %v601
      %v730 = vpop.f32.mrb[0].mxu0
      %v731 = vadd.f32 %v573, %v730
      %v732 = vpop.f32.mrb[0].mxu0
      %733 = vmatprep.mubr.f32.mxu0 0.0
      %734 = vmatmul.mubr.f32.gmra.mrb[0].mxu0 %v604
      %v735 = vpop.f32.mrb[0].mxu0
      %v736 = vadd.f32 %v573, %v735
      %v737 = vpop.f32.mrb[0].mxu0
      %738 = vmatprep.mubr.f32.mxu0 0.0
      %739 = vmatmul.mubr.f32.gmra.mrb[0].mxu0 %v607
      %v740 = vpop.f32.mrb[0].mxu0
      %v741 = vadd.f32 %v573, %v740
      %v742 = vpop.f32.mrb[0].mxu0
      %743 = vmatprep.mubr.f32.mxu0 0.0
      %744 = vmatmul.mubr.f32.gmra.mrb[0].mxu0 %v610
      %v745 = vpop.f32.mrb[0].mxu0
      %v746 = vadd.f32 %v573, %v745
      %v747 = vpop.f32.mrb[0].mxu0
      %748 = vmatprep.mubr.f32.mxu0 0.0
      %749 = vmatmul.mubr.f32.gmra.mrb[0].mxu0 %v613
      %v750 = vpop.f32.mrb[0].mxu0
      %v751 = vadd.f32 %v573, %v750
      %v752 = vpop.f32.mrb[0].mxu0
      %753 = vmatprep.mubr.f32.mxu0 0.0
      %754 = vmatmul.mubr.f32.gmra.mrb[0].mxu0 %v616
      %v755 = vpop.f32.mrb[0].mxu0
      %v756 = vadd.f32 %v573, %v755
      %v757 = vpop.f32.mrb[0].mxu0
      %758 = vmatprep.mubr.f32.mxu0 0.0
      %759 = vmatmul.mubr.f32.gmra.mrb[0].mxu0 %v619
      %v760 = vpop.f32.mrb[0].mxu0
      %v761 = vadd.f32 %v573, %v760
      %v762 = vpop.f32.mrb[0].mxu0
      %763 = vmatprep.mubr.f32.mxu0 0.0
      %764 = vmatmul.mubr.f32.gmra.mrb[0].mxu0 %v622
      %v765 = vpop.f32.mrb[0].mxu0
      %v766 = vadd.f32 %v573, %v765
      %v767 = vpop.f32.mrb[0].mxu0
      %768 = vdwg.mxu0
      %v769 = vmax.f32 %v691, 0.0
      %v770 = vmax.f32 %v696, 0.0
      %v771 = vmax.f32 %v701, 0.0
      %v772 = vmax.f32 %v706, 0.0
      %v773 = vmax.f32 %v711, 0.0
      %v774 = vmax.f32 %v716, 0.0
      %v775 = vmax.f32 %v721, 0.0
      %v776 = vmax.f32 %v726, 0.0
      %v777 = vmax.f32 %v731, 0.0
      %v778 = vmax.f32 %v736, 0.0
      %v779 = vmax.f32 %v741, 0.0
      %v780 = vmax.f32 %v746, 0.0
      %v781 = vmax.f32 %v751, 0.0
      %v782 = vmax.f32 %v756, 0.0
      %v783 = vmax.f32 %v761, 0.0
      %v784 = vmax.f32 %v766, 0.0
      %785 = vst.msk [vmem:[%s317] sm:$0xff] %vm575, %v769
      %786 = vst.msk [vmem:[%s317 + $0x8] sm:$0xff] %vm575, %v770
      %787 = vst.msk [vmem:[%s317 + $0x10] sm:$0xff] %vm575, %v771
      %788 = vst.msk [vmem:[%s317 + $0x18] sm:$0xff] %vm575, %v772
      %789 = vst.msk [vmem:[%s317 + $0x20] sm:$0xff] %vm575, %v773
      %790 = vst.msk [vmem:[%s317 + $0x28] sm:$0xff] %vm575, %v774
      %791 = vst.msk [vmem:[%s317 + $0x30] sm:$0xff] %vm575, %v775
      %792 = vst.msk [vmem:[%s317 + $0x38] sm:$0xff] %vm575, %v776
      %793 = vst.msk [vmem:[%s317 + $0x40] sm:$0xff] %vm575, %v777
      %794 = vst.msk [vmem:[%s317 + $0x48] sm:$0xff] %vm575, %v778
      %795 = vst.msk [vmem:[%s317 + $0x50] sm:$0xff] %vm575, %v779
      %796 = vst.msk [vmem:[%s317 + $0x58] sm:$0xff] %vm575, %v780
      %797 = vst.msk [vmem:[%s317 + $0x60] sm:$0xff] %vm575, %v781
      %798 = vst.msk [vmem:[%s317 + $0x68] sm:$0xff] %vm575, %v782
      %799 = vst.msk [vmem:[%s317 + $0x70] sm:$0xff] %vm575, %v783
      %800 = vst.msk [vmem:[%s317 + $0x78] sm:$0xff] %vm575, %v784
      %v801 = vld [vmem:[%s5] sm:$0xff]
      %v802 = vld [vmem:[%s5 + $0x8] sm:$0xff]
      %v803 = vld [vmem:[%s5 + $0x10] sm:$0xff]
      %v804 = vld [vmem:[%s5 + $0x18] sm:$0xff]
      %v805 = vld [vmem:[#allocation2] sm:$0x1]
      %v807 = vlaneseq
      %v808 = vshrl.u32 %v807, 7
      %v809 = vsub.s32 0, %v808
      %v810 = vrot.slane %v805, %v809
      %v813 = vsel %vm575, %v769, 0
      %v816 = vsel %vm575, %v770, 0
      %v819 = vsel %vm575, %v771, 0
      %v822 = vsel %vm575, %v772, 0
      %v825 = vsel %vm575, %v773, 0
      %v828 = vsel %vm575, %v774, 0
      %v831 = vsel %vm575, %v775, 0
      %v834 = vsel %vm575, %v776, 0
      %v837 = vsel %vm575, %v777, 0
      %v840 = vsel %vm575, %v778, 0
      %v843 = vsel %vm575, %v779, 0
      %v846 = vsel %vm575, %v780, 0
      %v849 = vsel %vm575, %v781, 0
      %v852 = vsel %vm575, %v782, 0
      %v855 = vsel %vm575, %v783, 0
      %v858 = vsel %vm575, %v784, 0
      %860 = vmatprep.subr.mxu0 0.0
      %861 = vmatpush1.msra.mxu0 %v801
      %862 = vmatprep.subr.mxu0 0.0
      %863 = vmatpush1.msra.mxu0 %v802
      %864 = vmatprep.subr.mxu0 0.0
      %865 = vmatpush1.msra.mxu0 %v803
      %866 = vmatprep.subr.mxu0 0.0
      %867 = vmatpush1.msra.mxu0 %v804
      %868 = vmatprep.subr.mxu0 0.0
      %869 = vmatpush1.msra.mxu0 0.0
      %870 = vmatprep.subr.mxu0 0.0
      %871 = vmatpush1.msra.mxu0 0.0
      %872 = vmatprep.subr.mxu0 0.0
      %873 = vmatpush1.msra.mxu0 0.0
      %874 = vmatprep.subr.mxu0 0.0
      %875 = vmatpush1.msra.mxu0 0.0
      %876 = vmatprep.subr.mxu0 0.0
      %877 = vmatpush1.msra.mxu0 0.0
      %878 = vmatprep.subr.mxu0 0.0
      %879 = vmatpush1.msra.mxu0 0.0
      %880 = vmatprep.subr.mxu0 0.0
      %881 = vmatpush1.msra.mxu0 0.0
      %882 = vmatprep.subr.mxu0 0.0
      %883 = vmatpush1.msra.mxu0 0.0
      %884 = vmatprep.subr.mxu0 0.0
      %885 = vmatpush1.msra.mxu0 0.0
      %886 = vmatprep.subr.mxu0 0.0
      %887 = vmatpush1.msra.mxu0 0.0
      %888 = vmatprep.subr.mxu0 0.0
      %889 = vmatpush1.msra.mxu0 0.0
      %890 = vmatprep.subr.mxu0 0.0
      %891 = vmatpush1.msra.mxu0 0.0
      %892 = vmatprep.subr.mxu0 0.0
      %893 = vmatpush1.msra.mxu0 0.0
      %894 = vmatprep.subr.mxu0 0.0
      %895 = vmatpush1.msra.mxu0 0.0
      %896 = vmatprep.subr.mxu0 0.0
      %897 = vmatpush1.msra.mxu0 0.0
      %898 = vmatprep.subr.mxu0 0.0
      %899 = vmatpush1.msra.mxu0 0.0
      %900 = vmatprep.subr.mxu0 0.0
      %901 = vmatpush1.msra.mxu0 0.0
      %902 = vmatprep.subr.mxu0 0.0
      %903 = vmatpush1.msra.mxu0 0.0
      %904 = vmatprep.subr.mxu0 0.0
      %905 = vmatpush1.msra.mxu0 0.0
      %906 = vmatprep.subr.mxu0 0.0
      %907 = vmatpush1.msra.mxu0 0.0
      %908 = vmatprep.subr.mxu0 0.0
      %909 = vmatpush1.msra.mxu0 0.0
      %910 = vmatprep.subr.mxu0 0.0
      %911 = vmatpush1.msra.mxu0 0.0
      %912 = vmatprep.subr.mxu0 0.0
      %913 = vmatpush1.msra.mxu0 0.0
      %914 = vmatprep.subr.mxu0 0.0
      %915 = vmatpush1.msra.mxu0 0.0
      %916 = vmatprep.subr.mxu0 0.0
      %917 = vmatpush1.msra.mxu0 0.0
      %918 = vmatprep.subr.mxu0 0.0
      %919 = vmatpush1.msra.mxu0 0.0
      %920 = vmatprep.subr.mxu0 0.0
      %921 = vmatpush1.msra.mxu0 0.0
      %922 = vmatprep.subr.mxu0 0.0
      %923 = vmatpush1.msra.mxu0 0.0
      %924 = vmatprep.mubr.f32.mxu0 0.0
      %925 = vmatmul.mubr.f32.gmra.mrb[0].mxu0 %v813
      %v926 = vpop.f32.mrb[0].mxu0
      %v927 = vadd.f32 %v810, %v926
      %v928 = vpop.f32.mrb[0].mxu0
      %929 = vmatprep.mubr.f32.mxu0 0.0
      %930 = vmatmul.mubr.f32.gmra.mrb[0].mxu0 %v816
      %v931 = vpop.f32.mrb[0].mxu0
      %v932 = vadd.f32 %v810, %v931
      %v933 = vpop.f32.mrb[0].mxu0
      %934 = vmatprep.mubr.f32.mxu0 0.0
      %935 = vmatmul.mubr.f32.gmra.mrb[0].mxu0 %v819
      %v936 = vpop.f32.mrb[0].mxu0
      %v937 = vadd.f32 %v810, %v936
      %v938 = vpop.f32.mrb[0].mxu0
      %939 = vmatprep.mubr.f32.mxu0 0.0
      %940 = vmatmul.mubr.f32.gmra.mrb[0].mxu0 %v822
      %v941 = vpop.f32.mrb[0].mxu0
      %v942 = vadd.f32 %v810, %v941
      %v943 = vpop.f32.mrb[0].mxu0
      %944 = vmatprep.mubr.f32.mxu0 0.0
      %945 = vmatmul.mubr.f32.gmra.mrb[0].mxu0 %v825
      %v946 = vpop.f32.mrb[0].mxu0
      %v947 = vadd.f32 %v810, %v946
      %v948 = vpop.f32.mrb[0].mxu0
      %949 = vmatprep.mubr.f32.mxu0 0.0
      %950 = vmatmul.mubr.f32.gmra.mrb[0].mxu0 %v828
      %v951 = vpop.f32.mrb[0].mxu0
      %v952 = vadd.f32 %v810, %v951
      %v953 = vpop.f32.mrb[0].mxu0
      %954 = vmatprep.mubr.f32.mxu0 0.0
      %955 = vmatmul.mubr.f32.gmra.mrb[0].mxu0 %v831
      %v956 = vpop.f32.mrb[0].mxu0
      %v957 = vadd.f32 %v810, %v956
      %v958 = vpop.f32.mrb[0].mxu0
      %959 = vmatprep.mubr.f32.mxu0 0.0
      %960 = vmatmul.mubr.f32.gmra.mrb[0].mxu0 %v834
      %v961 = vpop.f32.mrb[0].mxu0
      %v962 = vadd.f32 %v810, %v961
      %v963 = vpop.f32.mrb[0].mxu0
      %964 = vmatprep.mubr.f32.mxu0 0.0
      %965 = vmatmul.mubr.f32.gmra.mrb[0].mxu0 %v837
      %v966 = vpop.f32.mrb[0].mxu0
      %v967 = vadd.f32 %v810, %v966
      %v968 = vpop.f32.mrb[0].mxu0
      %969 = vmatprep.mubr.f32.mxu0 0.0
      %970 = vmatmul.mubr.f32.gmra.mrb[0].mxu0 %v840
      %v971 = vpop.f32.mrb[0].mxu0
      %v972 = vadd.f32 %v810, %v971
      %v973 = vpop.f32.mrb[0].mxu0
      %974 = vmatprep.mubr.f32.mxu0 0.0
      %975 = vmatmul.mubr.f32.gmra.mrb[0].mxu0 %v843
      %v976 = vpop.f32.mrb[0].mxu0
      %v977 = vadd.f32 %v810, %v976
      %v978 = vpop.f32.mrb[0].mxu0
      %979 = vmatprep.mubr.f32.mxu0 0.0
      %980 = vmatmul.mubr.f32.gmra.mrb[0].mxu0 %v846
      %v981 = vpop.f32.mrb[0].mxu0
      %v982 = vadd.f32 %v810, %v981
      %v983 = vpop.f32.mrb[0].mxu0
      %984 = vmatprep.mubr.f32.mxu0 0.0
      %985 = vmatmul.mubr.f32.gmra.mrb[0].mxu0 %v849
      %v986 = vpop.f32.mrb[0].mxu0
      %v987 = vadd.f32 %v810, %v986
      %v988 = vpop.f32.mrb[0].mxu0
      %989 = vmatprep.mubr.f32.mxu0 0.0
      %990 = vmatmul.mubr.f32.gmra.mrb[0].mxu0 %v852
      %v991 = vpop.f32.mrb[0].mxu0
      %v992 = vadd.f32 %v810, %v991
      %v993 = vpop.f32.mrb[0].mxu0
      %994 = vmatprep.mubr.f32.mxu0 0.0
      %995 = vmatmul.mubr.f32.gmra.mrb[0].mxu0 %v855
      %v996 = vpop.f32.mrb[0].mxu0
      %v997 = vadd.f32 %v810, %v996
      %v998 = vpop.f32.mrb[0].mxu0
      %999 = vmatprep.mubr.f32.mxu0 0.0
      %1000 = vmatmul.mubr.f32.gmra.mrb[0].mxu0 %v858
      %v1001 = vpop.f32.mrb[0].mxu0
      %v1002 = vadd.f32 %v810, %v1001
      %v1003 = vpop.f32.mrb[0].mxu0
      %1004 = vdwg.mxu0
      %vm1005 = vcmask 7168
      %1006 = vst.msk [vmem:[%s323] sm:$0xff] %vm1005, %v927
      %1007 = vst.msk [vmem:[%s323 + $0x8] sm:$0xff] %vm1005, %v932
      %1008 = vst.msk [vmem:[%s323 + $0x10] sm:$0xff] %vm1005, %v937
      %1009 = vst.msk [vmem:[%s323 + $0x18] sm:$0xff] %vm1005, %v942
      %1010 = vst.msk [vmem:[%s323 + $0x20] sm:$0xff] %vm1005, %v947
      %1011 = vst.msk [vmem:[%s323 + $0x28] sm:$0xff] %vm1005, %v952
      %1012 = vst.msk [vmem:[%s323 + $0x30] sm:$0xff] %vm1005, %v957
      %1013 = vst.msk [vmem:[%s323 + $0x38] sm:$0xff] %vm1005, %v962
      %1014 = vst.msk [vmem:[%s323 + $0x40] sm:$0xff] %vm1005, %v967
      %1015 = vst.msk [vmem:[%s323 + $0x48] sm:$0xff] %vm1005, %v972
      %1016 = vst.msk [vmem:[%s323 + $0x50] sm:$0xff] %vm1005, %v977
      %1017 = vst.msk [vmem:[%s323 + $0x58] sm:$0xff] %vm1005, %v982
      %1018 = vst.msk [vmem:[%s323 + $0x60] sm:$0xff] %vm1005, %v987
      %1019 = vst.msk [vmem:[%s323 + $0x68] sm:$0xff] %vm1005, %v992
      %1020 = vst.msk [vmem:[%s323 + $0x70] sm:$0xff] %vm1005, %v997
      %1021 = vst.msk [vmem:[%s323 + $0x78] sm:$0xff] %vm1005, %v1002
      %s1022 = smul.u32 16, %s22
      %p1023 = scmp.lt.s32.totalorder %s1022, 31
      %s1024 = scalar_select %p1023, %s1022, 31
      %s1025 = smul.addr %s1024, 8
      %s1026 = scalar_lea.vmem %s7, %s1025
      %s1027 = smul.u32 16, %s22
      %p1028 = scmp.lt.s32.totalorder %s1027, 31
      %s1029 = scalar_select %p1028, %s1027, 31
      %s1030 = smul.addr %s1029, 8
      %s1031 = scalar_lea.vmem %s8, %s1030
      // Predicated region
      $region49: #{tpu_custom_call.1} parent=47 // pred_check
        %p1032 = pneg %p192
      $region50: #{tpu_custom_call.1} parent=47 // pred_check_branch
        %1034 = sbr.rel (%p1032) target = $region52
      $region51: #{tpu_custom_call.1} parent=47 // pred_region
        %s1035 = smul.u32 16, %s22
      $region52: #{tpu_custom_call.1} parent=47 // pred_fallthru
        _
      // Predicated region
      $region53: #{tpu_custom_call.1} parent=47 // pred_check
        %p1036 = pneg %p218
      $region54: #{tpu_custom_call.1} parent=47 // pred_check_branch
        %1038 = sbr.rel (%p1036) target = $region56
      $region55: #{tpu_custom_call.1} parent=47 // pred_region
        %s1039 = smul.u32 16, %s22
      $region56: #{tpu_custom_call.1} parent=47 // pred_fallthru
        _
    $region48: #{tpu_custom_call.1} parent=5 // pred_fallthru
      _
    %p1040 = scmp.le.s32.totalorder 2, %s17
    // Predicated region
    $region57: #{tpu_custom_call.1} parent=5 // pred_check
      %p1041 = pneg %p1040
    $region58: #{tpu_custom_call.1} parent=5 // pred_check_branch
      %1043 = sbr.rel (%p1041) target = $region60
    $region59: #{tpu_custom_call.1} parent=5 // pred_region
      %s1044 = ssub.s32 %s17, 2
      // Predicated region
      $region61: #{tpu_custom_call.1} parent=59 // pred_check
        %p1045 = pneg %p198
      $region62: #{tpu_custom_call.1} parent=59 // pred_check_branch
        %1047 = sbr.rel (%p1045) target = $region64
      $region63: #{tpu_custom_call.1} parent=59 // pred_region
        %s1048 = smul.u32 16, %s23
        %p1049 = scmp.lt.s32.totalorder %s1048, 31
        %s1050 = scalar_select %p1049, %s1048, 31
        %s1051 = smul.addr %s1050, 8
        %s1052 = scalar_lea.vmem %s7, %s1051
      $region64: #{tpu_custom_call.1} parent=59 // pred_fallthru
        _
      // Predicated region
      $region65: #{tpu_custom_call.1} parent=59 // pred_check
        %p1053 = pneg %p224
      $region66: #{tpu_custom_call.1} parent=59 // pred_check_branch
        %1055 = sbr.rel (%p1053) target = $region68
      $region67: #{tpu_custom_call.1} parent=59 // pred_region
        %s1056 = smul.u32 16, %s23
        %p1057 = scmp.lt.s32.totalorder %s1056, 31
        %s1058 = scalar_select %p1057, %s1056, 31
        %s1059 = smul.addr %s1058, 8
        %s1060 = scalar_lea.vmem %s8, %s1059
      $region68: #{tpu_custom_call.1} parent=59 // pred_fallthru
        _
    $region60: #{tpu_custom_call.1} parent=5 // pred_fallthru
      _
  $region6: #{tpu_custom_call.1} parent=0 // loop_footer
    %s21 = sadd.s32 1, %s17
  $region7: #{tpu_custom_call.1} parent=0 // loop_footer_branch
    %16 = sbr.rel target = $region3
  $region8: #{tpu_custom_call.1} parent=0 // loop_exit
    _

</llo_original>
